<compile_context>
chip_gen: v7x
topology: tpu7x:2x2x1
jax: 0.10.0
libtpu: 0.0.40
codegen_flags: <defaults>
</compile_context>

<pallas_src>
import functools

import jax
import jax.numpy as jnp
from jax.experimental import pallas as pl
from jax.experimental.pallas import tpu as pltpu


HIDDEN_LAYERS = [256, 128, 64]
BN_EPS = 1e-5
LANE = 128             # pad feature dims to lane width for unmasked layouts
ALIGN = 16             # bf16 sublane packing -> batch tiles in 16-row steps
MAX_BATCH_TILE = 1024  # rows per grid step (~1-2 MiB VMEM / tile at these widths)


def _round_up(n: int, m: int) -> int:
    return ((n + m - 1) // m) * m


def _cdiv(a: int, b: int) -> int:
    return (a + b - 1) // b


def _mlp_kernel(x_ref, w1, c1, w2, c2, w3, c3, w4, c4, out_ref):
    """Fused MLP forward: 3x (Linear[+folded BN] -> ReLU) -> padded Linear.

    x_ref is bf16, weights bf16, biases f32; accumulation + epilogue in f32;
    output stored as bf16 (lane-dense 128 columns).
    """
    h = jnp.dot(x_ref[...], w1[...], preferred_element_type=jnp.float32) + c1[...]
    h = jnp.maximum(h, 0.0)

    h = jnp.dot(h.astype(jnp.bfloat16), w2[...],
                preferred_element_type=jnp.float32) + c2[...]
    h = jnp.maximum(h, 0.0)

    h = jnp.dot(h.astype(jnp.bfloat16), w3[...],
                preferred_element_type=jnp.float32) + c3[...]
    h = jnp.maximum(h, 0.0)

    out_ref[...] = (jnp.dot(h.astype(jnp.bfloat16), w4[...],
                            preferred_element_type=jnp.float32)
                    + c4[...]).astype(jnp.bfloat16)


@functools.partial(jax.jit, static_argnames=("num_classes",))
def enhanced_nn_forward(x, kernel_params, *, num_classes):
    """kernel_params = [w1,c1, w2,c2, w3,c3, w4,c4] (BN folded, dims padded)."""
    B, in_dim = x.shape
    w1, c1, w2, c2, w3, c3, w4, c4 = kernel_params
    padded_out = w4.shape[-1]

    # --- batch tiling: pick step count first, then tile size -----------------
    b_aligned = _round_up(B, ALIGN)
    num_tiles = _cdiv(b_aligned, MAX_BATCH_TILE)
    if num_tiles < 2 and B > 256:
        # Keep >=2 grid steps so v7x's two TensorCores both get a tile and the
        # x/out DMAs stay double-buffered; harmless on v5e/v6e.
        num_tiles = 2
    tb = _round_up(_cdiv(b_aligned, num_tiles), ALIGN)
    padded_b = tb * num_tiles

    # bf16 input at the kernel boundary halves the x DMA bytes.
    x = x.astype(jnp.bfloat16)
    if padded_b != B:
        x = jnp.pad(x, ((0, padded_b - B), (0, 0)))

    batch_map = lambda i: (i, 0)     # x / out tiles walk the batch axis
    resident_map = lambda i: (0, 0)  # weights stay resident across tiles

    in_specs = [pl.BlockSpec((tb, in_dim), batch_map)]
    in_specs += [pl.BlockSpec(p.shape, resident_map) for p in kernel_params]
    out_spec = pl.BlockSpec((tb, padded_out), batch_map)

    flops = 2 * padded_b * sum(int(w.shape[0]) * int(w.shape[1])
                               for w in (w1, w2, w3, w4))
    bytes_accessed = (padded_b * in_dim * 2                               # x bf16
                      + sum(int(p.size) * p.dtype.itemsize for p in kernel_params)
                      + padded_b * padded_out * 2)                        # out bf16
    cost = pl.CostEstimate(flops=flops, transcendentals=0,
                           bytes_accessed=bytes_accessed)

    out = pl.pallas_call(
        _mlp_kernel,
        out_shape=jax.ShapeDtypeStruct((padded_b, padded_out), jnp.bfloat16),
        grid=(num_tiles,),
        in_specs=in_specs,
        out_specs=out_spec,
        compiler_params=pltpu.CompilerParams(
            dimension_semantics=("parallel",)),
        cost_estimate=cost,
    )(x, *kernel_params)

    # Slice off batch/lane padding; upcast logits back to f32 for consumers.
    return out[:B, :num_classes].astype(jnp.float32)


def init_params(key, input_size, num_classes, hidden_layers=HIDDEN_LAYERS):
    """PyTorch-default-like init: Linear uniform +-1/sqrt(fan_in);
    BatchNorm1d gamma=1, beta=0, running_mean=0, running_var=1."""
    dims = [input_size] + list(hidden_layers) + [num_classes]
    raw = []
    for li in range(len(dims) - 1):
        fan_in, fan_out = dims[li], dims[li + 1]
        key, kw, kb = jax.random.split(key, 3)
        bound = 1.0 / (fan_in ** 0.5)
        w = jax.random.uniform(kw, (fan_in, fan_out), jnp.float32, -bound, bound)
        b = jax.random.uniform(kb, (1, fan_out), jnp.float32, -bound, bound)
        if li < len(hidden_layers):
            gamma = jnp.ones((1, fan_out), jnp.float32)
            beta = jnp.zeros((1, fan_out), jnp.float32)
            mean = jnp.zeros((1, fan_out), jnp.float32)
            var = jnp.ones((1, fan_out), jnp.float32)
            raw.append((w, b, gamma, beta, mean, var))
        else:
            raw.append((w, b, None, None, None, None))
    return raw


def fold_and_pack(raw_params, lane=LANE):
    """Fold eval-mode BN into each hidden Linear (W' = W*scale, c = b*scale+shift),
    cast weights to bf16 for the MXU, and zero-pad feature dims below 128 up to
    the lane width (hidden 64->128 and output num_classes->128) so every
    intermediate / the output is lane-dense.  The first layer's fan_in is NOT
    padded (pure extra HBM bytes for an HBM-bound kernel)."""
    packed = []
    in_pad_rows = 0  # row padding needed to match the previous layer's padded width
    for w, b, gamma, beta, mean, var in raw_params:
        fan_in, fan_out = w.shape
        if gamma is not None:  # hidden layer: fold BN
            scale = gamma / jnp.sqrt(var + BN_EPS)   # (1, out)
            w = w * scale                             # column scale
            c = b * scale + (beta - mean * scale)
        else:                  # output layer
            c = b
        out_padded = _round_up(fan_out, lane)
        pad_cols = out_padded - fan_out
        if in_pad_rows or pad_cols:
            w = jnp.pad(w, ((0, in_pad_rows), (0, pad_cols)))
            c = jnp.pad(c, ((0, 0), (0, pad_cols)))
        packed.append(w.astype(jnp.bfloat16))
        packed.append(c.astype(jnp.float32))
        in_pad_rows = pad_cols
    return packed


def reference_forward(x, kernel_params, num_classes):
    """Pure-JAX reference matching the kernel math (bf16 dot inputs, f32 acc,
    bf16 output, slice + upcast)."""
    w1, c1, w2, c2, w3, c3, w4, c4 = kernel_params

    def dot_bf16(a, w):
        return jnp.dot(a.astype(jnp.bfloat16).astype(jnp.float32),
                       w.astype(jnp.float32))

    h = jnp.maximum(dot_bf16(x, w1) + c1, 0.0)
    h = jnp.maximum(dot_bf16(h, w2) + c2, 0.0)
    h = jnp.maximum(dot_bf16(h, w3) + c3, 0.0)
    out = (dot_bf16(h, w4) + c4).astype(jnp.bfloat16)
    return out[:, :num_classes].astype(jnp.float32)


if __name__ == "__main__":
    key = jax.random.PRNGKey(0)
    batch = 8
    input_size = 32
    num_classes = 10

    key, kx, kp = jax.random.split(key, 3)
    x = jax.random.normal(kx, (batch, input_size), jnp.float32)
    raw = init_params(kp, input_size, num_classes)
    params = fold_and_pack(raw)

    out = enhanced_nn_forward(x, params, num_classes=num_classes)
    out = jax.block_until_ready(out)
    assert out.shape == (batch, num_classes)
    assert out.dtype == jnp.float32

    ref = reference_forward(x, params, num_classes)
    assert jnp.allclose(out, ref, atol=2e-2, rtol=2e-2), "mismatch vs reference"

    print("KERNEL_OK")
</pallas_src>

<mosaic_0001>
module attributes {stable_mosaic.version = 11 : i64} {
  func.func @_mlp_kernel(%arg0: i32, %arg1: memref<16x32xbf16, #tpu.memory_space<vmem>>, %arg2: memref<32x256xbf16, #tpu.memory_space<vmem>>, %arg3: memref<1x256xf32, #tpu.memory_space<vmem>>, %arg4: memref<256x128xbf16, #tpu.memory_space<vmem>>, %arg5: memref<1x128xf32, #tpu.memory_space<vmem>>, %arg6: memref<128x128xbf16, #tpu.memory_space<vmem>>, %arg7: memref<1x128xf32, #tpu.memory_space<vmem>>, %arg8: memref<128x128xbf16, #tpu.memory_space<vmem>>, %arg9: memref<1x128xf32, #tpu.memory_space<vmem>>, %arg10: memref<16x128xbf16, #tpu.memory_space<vmem>>) attributes {dimension_semantics = [#tpu.dimension_semantics<parallel>], iteration_bounds = array<i64: 1>, scalar_prefetch = 0 : i64, scratch_operands = 0 : i64, tpu.core_type = #tpu.core_type<tc>, window_params = [{transform_indices = @transform_0, window_bounds = array<i64: 16, 32>}, {pipeline_mode = #tpu.pipeline_mode<synchronous>, transform_indices = @transform_1, window_bounds = array<i64: 32, 256>}, {pipeline_mode = #tpu.pipeline_mode<synchronous>, transform_indices = @transform_2, window_bounds = array<i64: 1, 256>}, {pipeline_mode = #tpu.pipeline_mode<synchronous>, transform_indices = @transform_3, window_bounds = array<i64: 256, 128>}, {pipeline_mode = #tpu.pipeline_mode<synchronous>, transform_indices = @transform_4, window_bounds = array<i64: 1, 128>}, {pipeline_mode = #tpu.pipeline_mode<synchronous>, transform_indices = @transform_5, window_bounds = array<i64: 128, 128>}, {pipeline_mode = #tpu.pipeline_mode<synchronous>, transform_indices = @transform_6, window_bounds = array<i64: 1, 128>}, {pipeline_mode = #tpu.pipeline_mode<synchronous>, transform_indices = @transform_7, window_bounds = array<i64: 128, 128>}, {pipeline_mode = #tpu.pipeline_mode<synchronous>, transform_indices = @transform_8, window_bounds = array<i64: 1, 128>}, {transform_indices = @transform_9, window_bounds = array<i64: 16, 128>}]} {
    %c0 = arith.constant 0 : index
    %c0_0 = arith.constant 0 : index
    %0 = vector.load %arg1[%c0, %c0_0] : memref<16x32xbf16, #tpu.memory_space<vmem>>, vector<16x32xbf16>
    %c0_1 = arith.constant 0 : index
    %c0_2 = arith.constant 0 : index
    %1 = vector.load %arg2[%c0_1, %c0_2] : memref<32x256xbf16, #tpu.memory_space<vmem>>, vector<32x256xbf16>
    %cst = arith.constant dense<0.000000e+00> : vector<16x256xf32>
    %2 = tpu.matmul %0, %1, %cst {dimension_numbers = #tpu.dot_dimension_numbers<[1], [0], [0], [1], [0, 0, 1, 1], [], []>} : vector<16x32xbf16>, vector<32x256xbf16>, vector<16x256xf32> -> vector<16x256xf32>
    %c0_3 = arith.constant 0 : index
    %c0_4 = arith.constant 0 : index
    %3 = vector.load %arg3[%c0_3, %c0_4] : memref<1x256xf32, #tpu.memory_space<vmem>>, vector<1x256xf32>
    %4 = vector.broadcast %3 : vector<1x256xf32> to vector<16x256xf32>
    %5 = arith.addf %2, %4 : vector<16x256xf32>
    %cst_5 = arith.constant 0.000000e+00 : f32
    %6 = vector.broadcast %cst_5 : f32 to vector<16x256xf32>
    %7 = arith.maximumf %5, %6 : vector<16x256xf32>
    %8 = arith.truncf %7 : vector<16x256xf32> to vector<16x256xbf16>
    %c0_6 = arith.constant 0 : index
    %c0_7 = arith.constant 0 : index
    %9 = vector.load %arg4[%c0_6, %c0_7] : memref<256x128xbf16, #tpu.memory_space<vmem>>, vector<256x128xbf16>
    %cst_8 = arith.constant dense<0.000000e+00> : vector<16x128xf32>
    %10 = tpu.matmul %8, %9, %cst_8 {dimension_numbers = #tpu.dot_dimension_numbers<[1], [0], [0], [1], [0, 0, 1, 1], [], []>} : vector<16x256xbf16>, vector<256x128xbf16>, vector<16x128xf32> -> vector<16x128xf32>
    %c0_9 = arith.constant 0 : index
    %c0_10 = arith.constant 0 : index
    %11 = vector.load %arg5[%c0_9, %c0_10] : memref<1x128xf32, #tpu.memory_space<vmem>>, vector<1x128xf32>
    %12 = vector.broadcast %11 : vector<1x128xf32> to vector<16x128xf32>
    %13 = arith.addf %10, %12 : vector<16x128xf32>
    %cst_11 = arith.constant 0.000000e+00 : f32
    %14 = vector.broadcast %cst_11 : f32 to vector<16x128xf32>
    %15 = arith.maximumf %13, %14 : vector<16x128xf32>
    %16 = arith.truncf %15 : vector<16x128xf32> to vector<16x128xbf16>
    %c0_12 = arith.constant 0 : index
    %c0_13 = arith.constant 0 : index
    %17 = vector.load %arg6[%c0_12, %c0_13] : memref<128x128xbf16, #tpu.memory_space<vmem>>, vector<128x128xbf16>
    %cst_14 = arith.constant dense<0.000000e+00> : vector<16x128xf32>
    %18 = tpu.matmul %16, %17, %cst_14 {dimension_numbers = #tpu.dot_dimension_numbers<[1], [0], [0], [1], [0, 0, 1, 1], [], []>} : vector<16x128xbf16>, vector<128x128xbf16>, vector<16x128xf32> -> vector<16x128xf32>
    %c0_15 = arith.constant 0 : index
    %c0_16 = arith.constant 0 : index
    %19 = vector.load %arg7[%c0_15, %c0_16] : memref<1x128xf32, #tpu.memory_space<vmem>>, vector<1x128xf32>
    %20 = vector.broadcast %19 : vector<1x128xf32> to vector<16x128xf32>
    %21 = arith.addf %18, %20 : vector<16x128xf32>
    %cst_17 = arith.constant 0.000000e+00 : f32
    %22 = vector.broadcast %cst_17 : f32 to vector<16x128xf32>
    %23 = arith.maximumf %21, %22 : vector<16x128xf32>
    %24 = arith.truncf %23 : vector<16x128xf32> to vector<16x128xbf16>
    %c0_18 = arith.constant 0 : index
    %c0_19 = arith.constant 0 : index
    %25 = vector.load %arg8[%c0_18, %c0_19] : memref<128x128xbf16, #tpu.memory_space<vmem>>, vector<128x128xbf16>
    %cst_20 = arith.constant dense<0.000000e+00> : vector<16x128xf32>
    %26 = tpu.matmul %24, %25, %cst_20 {dimension_numbers = #tpu.dot_dimension_numbers<[1], [0], [0], [1], [0, 0, 1, 1], [], []>} : vector<16x128xbf16>, vector<128x128xbf16>, vector<16x128xf32> -> vector<16x128xf32>
    %c0_21 = arith.constant 0 : index
    %c0_22 = arith.constant 0 : index
    %27 = vector.load %arg9[%c0_21, %c0_22] : memref<1x128xf32, #tpu.memory_space<vmem>>, vector<1x128xf32>
    %28 = vector.broadcast %27 : vector<1x128xf32> to vector<16x128xf32>
    %29 = arith.addf %26, %28 : vector<16x128xf32>
    %30 = arith.truncf %29 : vector<16x128xf32> to vector<16x128xbf16>
    %c0_23 = arith.constant 0 : index
    %c0_24 = arith.constant 0 : index
    %31 = vector.load %arg10[%c0_23, %c0_24] : memref<16x128xbf16, #tpu.memory_space<vmem>>, vector<16x128xbf16>
    tpu.vector_store %arg10[%c0_23, %c0_24], %30 {strides = array<i32>} : memref<16x128xbf16, #tpu.memory_space<vmem>>, vector<16x128xbf16>,
    return
  }
  func.func @transform_0(%arg0: i32) -> (i32, i32) {
    %c0_i32 = arith.constant 0 : i32
    %c0_i32_0 = arith.constant 0 : i32
    return %arg0, %c0_i32 : i32, i32
  }
  func.func @transform_1(%arg0: i32) -> (i32, i32) {
    %c0_i32 = arith.constant 0 : i32
    %c0_i32_0 = arith.constant 0 : i32
    %c0_i32_1 = arith.constant 0 : i32
    return %c0_i32, %c0_i32_0 : i32, i32
  }
  func.func @transform_2(%arg0: i32) -> (i32, i32) {
    %c0_i32 = arith.constant 0 : i32
    %c0_i32_0 = arith.constant 0 : i32
    %c0_i32_1 = arith.constant 0 : i32
    return %c0_i32, %c0_i32_0 : i32, i32
  }
  func.func @transform_3(%arg0: i32) -> (i32, i32) {
    %c0_i32 = arith.constant 0 : i32
    %c0_i32_0 = arith.constant 0 : i32
    %c0_i32_1 = arith.constant 0 : i32
    return %c0_i32, %c0_i32_0 : i32, i32
  }
  func.func @transform_4(%arg0: i32) -> (i32, i32) {
    %c0_i32 = arith.constant 0 : i32
    %c0_i32_0 = arith.constant 0 : i32
    %c0_i32_1 = arith.constant 0 : i32
    return %c0_i32, %c0_i32_0 : i32, i32
  }
  func.func @transform_5(%arg0: i32) -> (i32, i32) {
    %c0_i32 = arith.constant 0 : i32
    %c0_i32_0 = arith.constant 0 : i32
    %c0_i32_1 = arith.constant 0 : i32
    return %c0_i32, %c0_i32_0 : i32, i32
  }
  func.func @transform_6(%arg0: i32) -> (i32, i32) {
    %c0_i32 = arith.constant 0 : i32
    %c0_i32_0 = arith.constant 0 : i32
    %c0_i32_1 = arith.constant 0 : i32
    return %c0_i32, %c0_i32_0 : i32, i32
  }
  func.func @transform_7(%arg0: i32) -> (i32, i32) {
    %c0_i32 = arith.constant 0 : i32
    %c0_i32_0 = arith.constant 0 : i32
    %c0_i32_1 = arith.constant 0 : i32
    return %c0_i32, %c0_i32_0 : i32, i32
  }
  func.func @transform_8(%arg0: i32) -> (i32, i32) {
    %c0_i32 = arith.constant 0 : i32
    %c0_i32_0 = arith.constant 0 : i32
    %c0_i32_1 = arith.constant 0 : i32
    return %c0_i32, %c0_i32_0 : i32, i32
  }
  func.func @transform_9(%arg0: i32) -> (i32, i32) {
    %c0_i32 = arith.constant 0 : i32
    %c0_i32_0 = arith.constant 0 : i32
    return %arg0, %c0_i32 : i32, i32
  }
}

</mosaic_0001>

<llo_original>
// kernel: enhanced_nn_forward.1
$region0: #{enhanced_nn_forward.1}
  #allocation0 [shape = 'u32[]', space=smem, size = 0x4, offset = 0x4, fixed_abs, tag = 'smem constant byte address 0x4 - core index']
  #allocation1 [shape = 'u32[144,128]{1,0:T(1,128)}', space=vmem, size = 0x12000, scoped, tag = 'internal scratch']
  %s0 = inlined_call_operand.vmem [shape: bf16[16,32], index: 0, kind: input, shape index: {}]
  %s1 = inlined_call_operand.hbm [shape: bf16[32,256], index: 1, kind: input, shape index: {}]
  %s2 = inlined_call_operand.vmem [shape: f32[1,256], index: 2, kind: input, shape index: {}]
  %s3 = inlined_call_operand.hbm [shape: bf16[256,128], index: 3, kind: input, shape index: {}]
  %s4 = inlined_call_operand.vmem [shape: f32[1,128], index: 4, kind: input, shape index: {}]
  %s5 = inlined_call_operand.hbm [shape: bf16[128,128], index: 5, kind: input, shape index: {}]
  %s6 = inlined_call_operand.vmem [shape: f32[1,128], index: 6, kind: input, shape index: {}]
  %s7 = inlined_call_operand.hbm [shape: bf16[128,128], index: 7, kind: input, shape index: {}]
  %s8 = inlined_call_operand.vmem [shape: f32[1,128], index: 8, kind: input, shape index: {}]
  %s9 = inlined_call_operand.vmem [shape: bf16[16,128], index: 9, kind: output, shape index: {}]
  %s10 = sld [smem:[#allocation0]]
  $region62: #{enhanced_nn_forward.1} parent=0
    _
  %s12 = ssub.s32 1, %s10
  %s13 = scalar_select 0, %s12, %s10
  $region1: #{enhanced_nn_forward.1} parent=0
    #allocation2 [shape = 'u8[16384]{0}', space=vmem, size = 0x4000, scoped, tag = 'input window, operand 1, single buffered']
    #allocation3 [shape = 's32[1]{0}', space=sflag, size = 0x4, scoped, tag = 'scoped memory for enhanced_nn_forward.1']
    #allocation4 [shape = 'u8[65536]{0}', space=vmem, size = 0x10000, scoped, tag = 'input window, operand 3, single buffered']
    #allocation5 [shape = 's32[1]{0}', space=sflag, size = 0x4, scoped, tag = 'scoped memory for enhanced_nn_forward.1']
    #allocation6 [shape = 'u8[32768]{0}', space=vmem, size = 0x8000, scoped, tag = 'input window, operand 5, single buffered']
    #allocation7 [shape = 'u8[32768]{0}', space=vmem, size = 0x8000, scoped, tag = 'input window, operand 7, single buffered']
    #allocation8 [shape = 's32[1]{0}', space=sflag, size = 0x4, scoped, tag = 'scoped memory for enhanced_nn_forward.1']
    %14 = vsyncpa [#allocation3], 0
    %15 = vsyncpa [#allocation5], 0
    %16 = vsyncpa [#allocation8], 0
    // Predicated region
    $region2: #{enhanced_nn_forward.1} parent=1 // pred_check
      _
    $region3: #{enhanced_nn_forward.1} parent=1 // pred_check_branch
      %18 = sbr.rel (0) target = $region5
    $region4: #{enhanced_nn_forward.1} parent=1 // pred_region
      _
    $region5: #{enhanced_nn_forward.1} parent=1 // pred_fallthru
      _
    // Predicated region
    $region6: #{enhanced_nn_forward.1} parent=1 // pred_check
      _
    $region7: #{enhanced_nn_forward.1} parent=1 // pred_check_branch
      %20 = sbr.rel (0) target = $region9
    $region8: #{enhanced_nn_forward.1} parent=1 // pred_region
      %s22 = ssub.s32 512, 512
      %23 = vsyncadd [#allocation3], %s22
      %s24 = sshll.u32 [#allocation2], 4
      %s25 = int_to_ptr.vmem [resolvable:$true] %s24
      %30 = dma.hbm_to_vmem [thread:$0]  %s1, 512, %s25, [#allocation3], 128, 128, 8
    $region9: #{enhanced_nn_forward.1} parent=1 // pred_fallthru
      _
    // Predicated region
    $region10: #{enhanced_nn_forward.1} parent=1 // pred_check
      _
    $region11: #{enhanced_nn_forward.1} parent=1 // pred_check_branch
      %32 = sbr.rel (0) target = $region13
    $region12: #{enhanced_nn_forward.1} parent=1 // pred_region
      _
    $region13: #{enhanced_nn_forward.1} parent=1 // pred_fallthru
      _
    // Predicated region
    $region14: #{enhanced_nn_forward.1} parent=1 // pred_check
      _
    $region15: #{enhanced_nn_forward.1} parent=1 // pred_check_branch
      %34 = sbr.rel (0) target = $region17
    $region16: #{enhanced_nn_forward.1} parent=1 // pred_region
      %s36 = ssub.s32 2048, 2048
      %37 = vsyncadd [#allocation5], %s36
      %s38 = sshll.u32 [#allocation4], 4
      %s39 = int_to_ptr.vmem [resolvable:$true] %s38
      %44 = dma.hbm_to_vmem [thread:$0]  %s3, 2048, %s39, [#allocation5], 64, 64, 4
    $region17: #{enhanced_nn_forward.1} parent=1 // pred_fallthru
      _
    // Predicated region
    $region18: #{enhanced_nn_forward.1} parent=1 // pred_check
      _
    $region19: #{enhanced_nn_forward.1} parent=1 // pred_check_branch
      %46 = sbr.rel (0) target = $region21
    $region20: #{enhanced_nn_forward.1} parent=1 // pred_region
      _
    $region21: #{enhanced_nn_forward.1} parent=1 // pred_fallthru
      _
    // Predicated region
    $region22: #{enhanced_nn_forward.1} parent=1 // pred_check
      _
    $region23: #{enhanced_nn_forward.1} parent=1 // pred_check_branch
      %48 = sbr.rel (0) target = $region25
    $region24: #{enhanced_nn_forward.1} parent=1 // pred_region
      %s50 = ssub.s32 1024, 1024
      %51 = vsyncadd [#allocation5], %s50
      %s52 = sshll.u32 [#allocation6], 4
      %s53 = int_to_ptr.vmem [resolvable:$true] %s52
      %58 = dma.hbm_to_vmem [thread:$0]  %s5, 1024, %s53, [#allocation5], 64, 64, 4
    $region25: #{enhanced_nn_forward.1} parent=1 // pred_fallthru
      _
    // Predicated region
    $region26: #{enhanced_nn_forward.1} parent=1 // pred_check
      _
    $region27: #{enhanced_nn_forward.1} parent=1 // pred_check_branch
      %60 = sbr.rel (0) target = $region29
    $region28: #{enhanced_nn_forward.1} parent=1 // pred_region
      _
    $region29: #{enhanced_nn_forward.1} parent=1 // pred_fallthru
      _
    // Predicated region
    $region30: #{enhanced_nn_forward.1} parent=1 // pred_check
      _
    $region31: #{enhanced_nn_forward.1} parent=1 // pred_check_branch
      %62 = sbr.rel (0) target = $region33
    $region32: #{enhanced_nn_forward.1} parent=1 // pred_region
      %s64 = ssub.s32 1024, 1024
      %65 = vsyncadd [#allocation8], %s64
      %s66 = sshll.u32 [#allocation7], 4
      %s67 = int_to_ptr.vmem [resolvable:$true] %s66
      %72 = dma.hbm_to_vmem [thread:$0]  %s7, 1024, %s67, [#allocation8], 64, 64, 4
    $region33: #{enhanced_nn_forward.1} parent=1 // pred_fallthru
      _
    // Predicated region
    $region34: #{enhanced_nn_forward.1} parent=1 // pred_check
      _
    $region35: #{enhanced_nn_forward.1} parent=1 // pred_check_branch
      %74 = sbr.rel (0) target = $region37
    $region36: #{enhanced_nn_forward.1} parent=1 // pred_region
      _
    $region37: #{enhanced_nn_forward.1} parent=1 // pred_fallthru
      _
    // Predicated region
    $region38: #{enhanced_nn_forward.1} parent=1 // pred_check
      _
    $region39: #{enhanced_nn_forward.1} parent=1 // pred_check_branch
      %76 = sbr.rel (0) target = $region41
    $region40: #{enhanced_nn_forward.1} parent=1 // pred_region
      %77 = dma.done [#allocation3], 512
    $region41: #{enhanced_nn_forward.1} parent=1 // pred_fallthru
      _
    // Predicated region
    $region42: #{enhanced_nn_forward.1} parent=1 // pred_check
      _
    $region43: #{enhanced_nn_forward.1} parent=1 // pred_check_branch
      %79 = sbr.rel (0) target = $region45
    $region44: #{enhanced_nn_forward.1} parent=1 // pred_region
      %80 = dma.done [#allocation5], 2048
    $region45: #{enhanced_nn_forward.1} parent=1 // pred_fallthru
      _
    // Predicated region
    $region46: #{enhanced_nn_forward.1} parent=1 // pred_check
      _
    $region47: #{enhanced_nn_forward.1} parent=1 // pred_check_branch
      %82 = sbr.rel (0) target = $region49
    $region48: #{enhanced_nn_forward.1} parent=1 // pred_region
      %83 = dma.done [#allocation5], 1024
    $region49: #{enhanced_nn_forward.1} parent=1 // pred_fallthru
      _
    // Predicated region
    $region50: #{enhanced_nn_forward.1} parent=1 // pred_check
      _
    $region51: #{enhanced_nn_forward.1} parent=1 // pred_check_branch
      %85 = sbr.rel (0) target = $region53
    $region52: #{enhanced_nn_forward.1} parent=1 // pred_region
      %86 = dma.done [#allocation8], 1024
    $region53: #{enhanced_nn_forward.1} parent=1 // pred_fallthru
      _
    %v88 = vld [vmem:[%s0] sm:$0xf]
    %v89 = vld [vmem:[%s0 + $0x4] sm:$0xf]
    %v90 = vld [vmem:[#allocation2] sm:$0xff]
    %v91 = vld [vmem:[#allocation2 + $0x8] sm:$0xff]
    %v92 = vld [vmem:[#allocation2 + $0x10] sm:$0xff]
    %v93 = vld [vmem:[#allocation2 + $0x18] sm:$0xff]
    %v94 = vld [vmem:[%s2] sm:$0x3]
    %v96 = vlaneseq
    %v97 = vshrl.u32 %v96, 7
    %v98 = vsub.s32 0, %v97
    %v99 = vrot.slane %v94, %v98
    %v100 = vlaneseq
    %v101 = vshrl.u32 %v100, 7
    %v102 = vsub.s32 1, %v101
    %v103 = vrot.slane %v94, %v102
    %v108 = vunpack.c.l.b16 %v88
    %v109 = vunpack.c.l.b16 %v89
    %v110 = vpack.c.b16 %v109, %v108
    %v115 = vunpack.c.l.b16 %v90
    %v116 = vunpack.c.h.b16 %v90
    %v117 = vunpack.c.l.b16 %v91
    %v118 = vunpack.c.h.b16 %v91
    %v119 = vunpack.c.l.b16 %v92
    %v120 = vunpack.c.h.b16 %v92
    %v121 = vunpack.c.l.b16 %v93
    %v122 = vunpack.c.h.b16 %v93
    %v123 = vpack.c.b16 %v117, %v115
    %v124 = vpack.c.b16 %v118, %v116
    %v125 = vpack.c.b16 %v121, %v119
    %v126 = vpack.c.b16 %v122, %v120
    %vm131 = vcmask 261120
    %v133 = vsel %vm131, %v110, 0
    %135 = vmatprep.subr.bf16.mxu0 %v124
    %136 = vmatpush1.bf16.msra.mxu0 %v123
    %137 = vmatprep.subr.bf16.mxu0 %v126
    %138 = vmatpush1.bf16.msra.mxu0 %v125
    %139 = vmatprep.subr.bf16.mxu0 0
    %140 = vmatpush1.bf16.msra.mxu0 0
    %141 = vmatprep.subr.bf16.mxu0 0
    %142 = vmatpush1.bf16.msra.mxu0 0
    %143 = vmatprep.subr.bf16.mxu0 0
    %144 = vmatpush1.bf16.msra.mxu0 0
    %145 = vmatprep.subr.bf16.mxu0 0
    %146 = vmatpush1.bf16.msra.mxu0 0
    %147 = vmatprep.subr.bf16.mxu0 0
    %148 = vmatpush1.bf16.msra.mxu0 0
    %149 = vmatprep.subr.bf16.mxu0 0
    %150 = vmatpush1.bf16.msra.mxu0 0
    %151 = vmatprep.subr.bf16.mxu0 0
    %152 = vmatpush1.bf16.msra.mxu0 0
    %153 = vmatprep.subr.bf16.mxu0 0
    %154 = vmatpush1.bf16.msra.mxu0 0
    %155 = vmatprep.subr.bf16.mxu0 0
    %156 = vmatpush1.bf16.msra.mxu0 0
    %157 = vmatprep.subr.bf16.mxu0 0
    %158 = vmatpush1.bf16.msra.mxu0 0
    %159 = vmatprep.subr.bf16.mxu0 0
    %160 = vmatpush1.bf16.msra.mxu0 0
    %161 = vmatprep.subr.bf16.mxu0 0
    %162 = vmatpush1.bf16.msra.mxu0 0
    %163 = vmatprep.subr.bf16.mxu0 0
    %164 = vmatpush1.bf16.msra.mxu0 0
    %165 = vmatprep.subr.bf16.mxu0 0
    %166 = vmatpush1.bf16.msra.mxu0 0
    %167 = vmatprep.mubr.bf16.mxu0 0
    %168 = vmatmul.mubr.bf16.gmra.mrb[0].mxu0 %v133
    %v169 = vpop.f32.mrb[0].mxu0
    %v170 = vadd.f32 %v99, %v169
    %v171 = vpop.f32.mrb[0].mxu0
    %v172 = vadd.f32 %v103, %v171
    %v173 = vpop.f32.mrb[0].mxu0
    %v174 = vadd.f32 %v99, %v173
    %v175 = vpop.f32.mrb[0].mxu0
    %v176 = vadd.f32 %v103, %v175
    %177 = vdwg.mxu0
    %v178 = vmax.f32 %v170, 0.0
    %v179 = vmax.f32 %v172, 0.0
    %v180 = vmax.f32 %v174, 0.0
    %v181 = vmax.f32 %v176, 0.0
    %v182 = vpack.c.bf16 %v180, %v178
    %v183 = vpack.c.bf16 %v181, %v179
    %v184 = vld [vmem:[#allocation4] sm:$0xf]
    %v185 = vld [vmem:[#allocation4 + $0x4] sm:$0xf]
    %v186 = vld [vmem:[#allocation4 + $0x8] sm:$0xf]
    %v187 = vld [vmem:[#allocation4 + $0xc] sm:$0xf]
    %v188 = vld [vmem:[#allocation4 + $0x10] sm:$0xf]
    %v189 = vld [vmem:[#allocation4 + $0x14] sm:$0xf]
    %v190 = vld [vmem:[#allocation4 + $0x18] sm:$0xf]
    %v191 = vld [vmem:[#allocation4 + $0x1c] sm:$0xf]
    %v192 = vld [vmem:[#allocation4 + $0x20] sm:$0xf]
    %v193 = vld [vmem:[#allocation4 + $0x24] sm:$0xf]
    %v194 = vld [vmem:[#allocation4 + $0x28] sm:$0xf]
    %v195 = vld [vmem:[#allocation4 + $0x2c] sm:$0xf]
    %v196 = vld [vmem:[#allocation4 + $0x30] sm:$0xf]
    %v197 = vld [vmem:[#allocation4 + $0x34] sm:$0xf]
    %v198 = vld [vmem:[#allocation4 + $0x38] sm:$0xf]
    %v199 = vld [vmem:[#allocation4 + $0x3c] sm:$0xf]
    %v200 = vld [vmem:[#allocation4 + $0x40] sm:$0xf]
    %v201 = vld [vmem:[#allocation4 + $0x44] sm:$0xf]
    %v202 = vld [vmem:[#allocation4 + $0x48] sm:$0xf]
    %v203 = vld [vmem:[#allocation4 + $0x4c] sm:$0xf]
    %v204 = vld [vmem:[#allocation4 + $0x50] sm:$0xf]
    %v205 = vld [vmem:[#allocation4 + $0x54] sm:$0xf]
    %v206 = vld [vmem:[#allocation4 + $0x58] sm:$0xf]
    %v207 = vld [vmem:[#allocation4 + $0x5c] sm:$0xf]
    %v208 = vld [vmem:[#allocation4 + $0x60] sm:$0xf]
    %v209 = vld [vmem:[#allocation4 + $0x64] sm:$0xf]
    %v210 = vld [vmem:[#allocation4 + $0x68] sm:$0xf]
    %v211 = vld [vmem:[#allocation4 + $0x6c] sm:$0xf]
    %v212 = vld [vmem:[#allocation4 + $0x70] sm:$0xf]
    %v213 = vld [vmem:[#allocation4 + $0x74] sm:$0xf]
    %v214 = vld [vmem:[#allocation4 + $0x78] sm:$0xf]
    %v215 = vld [vmem:[#allocation4 + $0x7c] sm:$0xf]
    %v216 = vld [vmem:[%s4] sm:$0x1]
    %v218 = vlaneseq
    %v219 = vshrl.u32 %v218, 7
    %v220 = vsub.s32 0, %v219
    %v221 = vrot.slane %v216, %v220
    %v255 = vunpack.c.l.b16 %v184
    %v256 = vunpack.c.l.b16 %v185
    %v257 = vunpack.c.l.b16 %v186
    %v258 = vunpack.c.l.b16 %v187
    %v259 = vunpack.c.l.b16 %v188
    %v260 = vunpack.c.l.b16 %v189
    %v261 = vunpack.c.l.b16 %v190
    %v262 = vunpack.c.l.b16 %v191
    %v263 = vunpack.c.l.b16 %v192
    %v264 = vunpack.c.l.b16 %v193
    %v265 = vunpack.c.l.b16 %v194
    %v266 = vunpack.c.l.b16 %v195
    %v267 = vunpack.c.l.b16 %v196
    %v268 = vunpack.c.l.b16 %v197
    %v269 = vunpack.c.l.b16 %v198
    %v270 = vunpack.c.l.b16 %v199
    %v271 = vunpack.c.l.b16 %v200
    %v272 = vunpack.c.l.b16 %v201
    %v273 = vunpack.c.l.b16 %v202
    %v274 = vunpack.c.l.b16 %v203
    %v275 = vunpack.c.l.b16 %v204
    %v276 = vunpack.c.l.b16 %v205
    %v277 = vunpack.c.l.b16 %v206
    %v278 = vunpack.c.l.b16 %v207
    %v279 = vunpack.c.l.b16 %v208
    %v280 = vunpack.c.l.b16 %v209
    %v281 = vunpack.c.l.b16 %v210
    %v282 = vunpack.c.l.b16 %v211
    %v283 = vunpack.c.l.b16 %v212
    %v284 = vunpack.c.l.b16 %v213
    %v285 = vunpack.c.l.b16 %v214
    %v286 = vunpack.c.l.b16 %v215
    %v287 = vpack.c.b16 %v256, %v255
    %v288 = vpack.c.b16 %v258, %v257
    %v289 = vpack.c.b16 %v260, %v259
    %v290 = vpack.c.b16 %v262, %v261
    %v291 = vpack.c.b16 %v264, %v263
    %v292 = vpack.c.b16 %v266, %v265
    %v293 = vpack.c.b16 %v268, %v267
    %v294 = vpack.c.b16 %v270, %v269
    %v295 = vpack.c.b16 %v272, %v271
    %v296 = vpack.c.b16 %v274, %v273
    %v297 = vpack.c.b16 %v276, %v275
    %v298 = vpack.c.b16 %v278, %v277
    %v299 = vpack.c.b16 %v280, %v279
    %v300 = vpack.c.b16 %v282, %v281
    %v301 = vpack.c.b16 %v284, %v283
    %v302 = vpack.c.b16 %v286, %v285
    %319 = vmatprep.subr.bf16.mxu0 0
    %320 = vmatpush1.bf16.msra.mxu0 %v287
    %321 = vmatprep.subr.bf16.mxu0 0
    %322 = vmatpush1.bf16.msra.mxu0 %v288
    %323 = vmatprep.subr.bf16.mxu0 0
    %324 = vmatpush1.bf16.msra.mxu0 %v289
    %325 = vmatprep.subr.bf16.mxu0 0
    %326 = vmatpush1.bf16.msra.mxu0 %v290
    %327 = vmatprep.subr.bf16.mxu0 0
    %328 = vmatpush1.bf16.msra.mxu0 %v291
    %329 = vmatprep.subr.bf16.mxu0 0
    %330 = vmatpush1.bf16.msra.mxu0 %v292
    %331 = vmatprep.subr.bf16.mxu0 0
    %332 = vmatpush1.bf16.msra.mxu0 %v293
    %333 = vmatprep.subr.bf16.mxu0 0
    %334 = vmatpush1.bf16.msra.mxu0 %v294
    %335 = vmatprep.subr.bf16.mxu0 0
    %336 = vmatpush1.bf16.msra.mxu0 %v295
    %337 = vmatprep.subr.bf16.mxu0 0
    %338 = vmatpush1.bf16.msra.mxu0 %v296
    %339 = vmatprep.subr.bf16.mxu0 0
    %340 = vmatpush1.bf16.msra.mxu0 %v297
    %341 = vmatprep.subr.bf16.mxu0 0
    %342 = vmatpush1.bf16.msra.mxu0 %v298
    %343 = vmatprep.subr.bf16.mxu0 0
    %344 = vmatpush1.bf16.msra.mxu0 %v299
    %345 = vmatprep.subr.bf16.mxu0 0
    %346 = vmatpush1.bf16.msra.mxu0 %v300
    %347 = vmatprep.subr.bf16.mxu0 0
    %348 = vmatpush1.bf16.msra.mxu0 %v301
    %349 = vmatprep.subr.bf16.mxu0 0
    %350 = vmatpush1.bf16.msra.mxu0 %v302
    %351 = vmatprep.mubr.bf16.mxu0 %v183
    %352 = vmatmul.mubr.bf16.gmra.mrb[0].mxu0 %v182
    %v353 = vpop.f32.mrb[0].mxu0
    %v354 = vadd.f32 %v221, %v353
    %v355 = vpop.f32.mrb[0].mxu0
    %v356 = vpop.f32.mrb[0].mxu0
    %v357 = vadd.f32 %v221, %v356
    %v358 = vpop.f32.mrb[0].mxu0
    %359 = vdwg.mxu0
    %v360 = vmax.f32 %v354, 0.0
    %v361 = vmax.f32 %v357, 0.0
    %v362 = vpack.c.bf16 %v361, %v360
    %v363 = vld [vmem:[#allocation6] sm:$0xf]
    %v364 = vld [vmem:[#allocation6 + $0x4] sm:$0xf]
    %v365 = vld [vmem:[#allocation6 + $0x8] sm:$0xf]
    %v366 = vld [vmem:[#allocation6 + $0xc] sm:$0xf]
    %v367 = vld [vmem:[#allocation6 + $0x10] sm:$0xf]
    %v368 = vld [vmem:[#allocation6 + $0x14] sm:$0xf]
    %v369 = vld [vmem:[#allocation6 + $0x18] sm:$0xf]
    %v370 = vld [vmem:[#allocation6 + $0x1c] sm:$0xf]
    %v371 = vld [vmem:[#allocation6 + $0x20] sm:$0xf]
    %v372 = vld [vmem:[#allocation6 + $0x24] sm:$0xf]
    %v373 = vld [vmem:[#allocation6 + $0x28] sm:$0xf]
    %v374 = vld [vmem:[#allocation6 + $0x2c] sm:$0xf]
    %v375 = vld [vmem:[#allocation6 + $0x30] sm:$0xf]
    %v376 = vld [vmem:[#allocation6 + $0x34] sm:$0xf]
    %v377 = vld [vmem:[#allocation6 + $0x38] sm:$0xf]
    %v378 = vld [vmem:[#allocation6 + $0x3c] sm:$0xf]
    %v379 = vld [vmem:[%s6] sm:$0x1]
    %v381 = vlaneseq
    %v382 = vshrl.u32 %v381, 7
    %v383 = vsub.s32 0, %v382
    %v384 = vrot.slane %v379, %v383
    %v402 = vunpack.c.l.b16 %v363
    %v403 = vunpack.c.l.b16 %v364
    %v404 = vunpack.c.l.b16 %v365
    %v405 = vunpack.c.l.b16 %v366
    %v406 = vunpack.c.l.b16 %v367
    %v407 = vunpack.c.l.b16 %v368
    %v408 = vunpack.c.l.b16 %v369
    %v409 = vunpack.c.l.b16 %v370
    %v410 = vunpack.c.l.b16 %v371
    %v411 = vunpack.c.l.b16 %v372
    %v412 = vunpack.c.l.b16 %v373
    %v413 = vunpack.c.l.b16 %v374
    %v414 = vunpack.c.l.b16 %v375
    %v415 = vunpack.c.l.b16 %v376
    %v416 = vunpack.c.l.b16 %v377
    %v417 = vunpack.c.l.b16 %v378
    %v418 = vpack.c.b16 %v403, %v402
    %v419 = vpack.c.b16 %v405, %v404
    %v420 = vpack.c.b16 %v407, %v406
    %v421 = vpack.c.b16 %v409, %v408
    %v422 = vpack.c.b16 %v411, %v410
    %v423 = vpack.c.b16 %v413, %v412
    %v424 = vpack.c.b16 %v415, %v414
    %v425 = vpack.c.b16 %v417, %v416
    %434 = vmatprep.subr.bf16.mxu0 0
    %435 = vmatpush1.bf16.msra.mxu0 %v418
    %436 = vmatprep.subr.bf16.mxu0 0
    %437 = vmatpush1.bf16.msra.mxu0 %v419
    %438 = vmatprep.subr.bf16.mxu0 0
    %439 = vmatpush1.bf16.msra.mxu0 %v420
    %440 = vmatprep.subr.bf16.mxu0 0
    %441 = vmatpush1.bf16.msra.mxu0 %v421
    %442 = vmatprep.subr.bf16.mxu0 0
    %443 = vmatpush1.bf16.msra.mxu0 %v422
    %444 = vmatprep.subr.bf16.mxu0 0
    %445 = vmatpush1.bf16.msra.mxu0 %v423
    %446 = vmatprep.subr.bf16.mxu0 0
    %447 = vmatpush1.bf16.msra.mxu0 %v424
    %448 = vmatprep.subr.bf16.mxu0 0
    %449 = vmatpush1.bf16.msra.mxu0 %v425
    %450 = vmatprep.subr.bf16.mxu0 0
    %451 = vmatpush1.bf16.msra.mxu0 0
    %452 = vmatprep.subr.bf16.mxu0 0
    %453 = vmatpush1.bf16.msra.mxu0 0
    %454 = vmatprep.subr.bf16.mxu0 0
    %455 = vmatpush1.bf16.msra.mxu0 0
    %456 = vmatprep.subr.bf16.mxu0 0
    %457 = vmatpush1.bf16.msra.mxu0 0
    %458 = vmatprep.subr.bf16.mxu0 0
    %459 = vmatpush1.bf16.msra.mxu0 0
    %460 = vmatprep.subr.bf16.mxu0 0
    %461 = vmatpush1.bf16.msra.mxu0 0
    %462 = vmatprep.subr.bf16.mxu0 0
    %463 = vmatpush1.bf16.msra.mxu0 0
    %464 = vmatprep.subr.bf16.mxu0 0
    %465 = vmatpush1.bf16.msra.mxu0 0
    %466 = vmatprep.mubr.bf16.mxu0 0
    %467 = vmatmul.mubr.bf16.gmra.mrb[0].mxu0 %v362
    %v468 = vpop.f32.mrb[0].mxu0
    %v469 = vadd.f32 %v384, %v468
    %v470 = vpop.f32.mrb[0].mxu0
    %v471 = vpop.f32.mrb[0].mxu0
    %v472 = vadd.f32 %v384, %v471
    %v473 = vpop.f32.mrb[0].mxu0
    %474 = vdwg.mxu0
    %v475 = vmax.f32 %v469, 0.0
    %v476 = vmax.f32 %v472, 0.0
    %v477 = vpack.c.bf16 %v476, %v475
    %v478 = vld [vmem:[#allocation7] sm:$0xf]
    %v479 = vld [vmem:[#allocation7 + $0x4] sm:$0xf]
    %v480 = vld [vmem:[#allocation7 + $0x8] sm:$0xf]
    %v481 = vld [vmem:[#allocation7 + $0xc] sm:$0xf]
    %v482 = vld [vmem:[#allocation7 + $0x10] sm:$0xf]
    %v483 = vld [vmem:[#allocation7 + $0x14] sm:$0xf]
    %v484 = vld [vmem:[#allocation7 + $0x18] sm:$0xf]
    %v485 = vld [vmem:[#allocation7 + $0x1c] sm:$0xf]
    %v486 = vld [vmem:[#allocation7 + $0x20] sm:$0xf]
    %v487 = vld [vmem:[#allocation7 + $0x24] sm:$0xf]
    %v488 = vld [vmem:[#allocation7 + $0x28] sm:$0xf]
    %v489 = vld [vmem:[#allocation7 + $0x2c] sm:$0xf]
    %v490 = vld [vmem:[#allocation7 + $0x30] sm:$0xf]
    %v491 = vld [vmem:[#allocation7 + $0x34] sm:$0xf]
    %v492 = vld [vmem:[#allocation7 + $0x38] sm:$0xf]
    %v493 = vld [vmem:[#allocation7 + $0x3c] sm:$0xf]
    %v494 = vld [vmem:[%s8] sm:$0x1]
    %v496 = vlaneseq
    %v497 = vshrl.u32 %v496, 7
    %v498 = vsub.s32 0, %v497
    %v499 = vrot.slane %v494, %v498
    %v517 = vunpack.c.l.b16 %v478
    %v518 = vunpack.c.l.b16 %v479
    %v519 = vunpack.c.l.b16 %v480
    %v520 = vunpack.c.l.b16 %v481
    %v521 = vunpack.c.l.b16 %v482
    %v522 = vunpack.c.l.b16 %v483
    %v523 = vunpack.c.l.b16 %v484
    %v524 = vunpack.c.l.b16 %v485
    %v525 = vunpack.c.l.b16 %v486
    %v526 = vunpack.c.l.b16 %v487
    %v527 = vunpack.c.l.b16 %v488
    %v528 = vunpack.c.l.b16 %v489
    %v529 = vunpack.c.l.b16 %v490
    %v530 = vunpack.c.l.b16 %v491
    %v531 = vunpack.c.l.b16 %v492
    %v532 = vunpack.c.l.b16 %v493
    %v533 = vpack.c.b16 %v518, %v517
    %v534 = vpack.c.b16 %v520, %v519
    %v535 = vpack.c.b16 %v522, %v521
    %v536 = vpack.c.b16 %v524, %v523
    %v537 = vpack.c.b16 %v526, %v525
    %v538 = vpack.c.b16 %v528, %v527
    %v539 = vpack.c.b16 %v530, %v529
    %v540 = vpack.c.b16 %v532, %v531
    %549 = vmatprep.subr.bf16.mxu0 0
    %550 = vmatpush1.bf16.msra.mxu0 %v533
    %551 = vmatprep.subr.bf16.mxu0 0
    %552 = vmatpush1.bf16.msra.mxu0 %v534
    %553 = vmatprep.subr.bf16.mxu0 0
    %554 = vmatpush1.bf16.msra.mxu0 %v535
    %555 = vmatprep.subr.bf16.mxu0 0
    %556 = vmatpush1.bf16.msra.mxu0 %v536
    %557 = vmatprep.subr.bf16.mxu0 0
    %558 = vmatpush1.bf16.msra.mxu0 %v537
    %559 = vmatprep.subr.bf16.mxu0 0
    %560 = vmatpush1.bf16.msra.mxu0 %v538
    %561 = vmatprep.subr.bf16.mxu0 0
    %562 = vmatpush1.bf16.msra.mxu0 %v539
    %563 = vmatprep.subr.bf16.mxu0 0
    %564 = vmatpush1.bf16.msra.mxu0 %v540
    %565 = vmatprep.subr.bf16.mxu0 0
    %566 = vmatpush1.bf16.msra.mxu0 0
    %567 = vmatprep.subr.bf16.mxu0 0
    %568 = vmatpush1.bf16.msra.mxu0 0
    %569 = vmatprep.subr.bf16.mxu0 0
    %570 = vmatpush1.bf16.msra.mxu0 0
    %571 = vmatprep.subr.bf16.mxu0 0
    %572 = vmatpush1.bf16.msra.mxu0 0
    %573 = vmatprep.subr.bf16.mxu0 0
    %574 = vmatpush1.bf16.msra.mxu0 0
    %575 = vmatprep.subr.bf16.mxu0 0
    %576 = vmatpush1.bf16.msra.mxu0 0
    %577 = vmatprep.subr.bf16.mxu0 0
    %578 = vmatpush1.bf16.msra.mxu0 0
    %579 = vmatprep.subr.bf16.mxu0 0
    %580 = vmatpush1.bf16.msra.mxu0 0
    %581 = vmatprep.mubr.bf16.mxu0 0
    %582 = vmatmul.mubr.bf16.gmra.mrb[0].mxu0 %v477
    %v583 = vpop.f32.mrb[0].mxu0
    %v584 = vadd.f32 %v499, %v583
    %v585 = vpop.f32.mrb[0].mxu0
    %v586 = vpop.f32.mrb[0].mxu0
    %v587 = vadd.f32 %v499, %v586
    %v588 = vpop.f32.mrb[0].mxu0
    %589 = vdwg.mxu0
    %v590 = vpack.c.bf16 %v587, %v584
    %v592 = vunpack.c.l.b16 %v590
    %v593 = vunpack.c.h.b16 %v590
    %v594 = vpack.c.b16 %v592, %v592
    %v595 = vpack.c.b16 %v593, %v593
    %598 = vst [vmem:[%s9] sm:$0xf] %v594
    %599 = vst [vmem:[%s9 + $0x4] sm:$0xf] %v595
    // Predicated region
    $region54: #{enhanced_nn_forward.1} parent=1 // pred_check
      _
    $region55: #{enhanced_nn_forward.1} parent=1 // pred_check_branch
      %601 = sbr.rel (0) target = $region57
    $region56: #{enhanced_nn_forward.1} parent=1 // pred_region
      _
    $region57: #{enhanced_nn_forward.1} parent=1 // pred_fallthru
      _
    // Predicated region
    $region58: #{enhanced_nn_forward.1} parent=1 // pred_check
      _
    $region59: #{enhanced_nn_forward.1} parent=1 // pred_check_branch
      %603 = sbr.rel (0) target = $region61
    $region60: #{enhanced_nn_forward.1} parent=1 // pred_region
      _
    $region61: #{enhanced_nn_forward.1} parent=1 // pred_fallthru
      _
    %604 = vsyncpa [#allocation3], 1
    %605 = vsyncpa [#allocation5], 1
    %606 = vsyncpa [#allocation8], 1

</llo_original>
